<compile_context>
chip_gen: v5e
topology: v5e:2x2
jax: 0.10.0
libtpu: 0.0.40
codegen_flags: <defaults>
</compile_context>

<pallas_src>
import functools

import jax
import jax.numpy as jnp
from jax import lax
from jax.experimental import pallas as pl
from jax.experimental.pallas import tpu as pltpu

block_size = 32
n_embd = 64
num_heads = 2
head_size = 32          # head_size * num_heads == n_embd (as in the module's comments)


def _fused_mha_kernel(x_ref, wqkv_ref, wproj_bd_ref, bproj_ref, o_ref, *, B, T):
    """Single-step fused MHA.

    x_ref:        (B*T, C)        flattened batch for the projections
    wqkv_ref:     (3*H, C, hs)    stacked [q_h0, q_h1, k_h0, k_h1, v_h0, v_h1]
    wproj_bd_ref: (B*H*hs, B*C)   block-diagonal output projection (over batch)
    bproj_ref:    (1, B*C)        output bias tiled per batch
    o_ref:        (T, B*C)        lane-dense output slab
    """
    H, hs = num_heads, head_size
    scale = float(n_embd) ** -0.5    # faithful: PyTorch scales by C**-0.5, C = n_embd

    x = x_ref[...]                                                     # (B*T, C)

    # Six lane-aligned projections: each (B*T, hs) result starts at lane 0 of
    # its own vreg -> no sub-128-lane slices of a fused QKV result downstream.
    q = [jnp.dot(x, wqkv_ref[h], preferred_element_type=jnp.float32) for h in range(H)]
    k = [jnp.dot(x, wqkv_ref[H + h], preferred_element_type=jnp.float32) for h in range(H)]
    v = [jnp.dot(x, wqkv_ref[2 * H + h], preferred_element_type=jnp.float32) for h in range(H)]

    # Per-(batch, head) attention; B = H = 2 -> 4 tiles, loops fully unrolled.
    cols = []
    for b in range(B):                       # static python loop (unrolled)
        lo, hi = b * T, (b + 1) * T          # sublane (row) slice: no lane reshuffle
        for h in range(H):
            qh = q[h][lo:hi, :]                                       # (T, hs)
            kh = k[h][lo:hi, :]
            vh = v[h][lo:hi, :]
            # q @ k.T without an explicit transpose: contract last axes directly.
            wei = lax.dot_general(qh, kh, (((1,), (1,)), ((), ())),
                                  preferred_element_type=jnp.float32) * scale  # (T, T)
            # NOTE: reference discards the masked_fill result -> unmasked softmax.
            m = jnp.max(wei, axis=-1, keepdims=True)
            e = jnp.exp(wei - m)
            s = jnp.sum(e, axis=-1, keepdims=True)
            acc = jnp.dot(e, vh, preferred_element_type=jnp.float32)  # (T, hs)
            # Fold 1/s past the PV matmul; approx reciprocal runs on the EUP slot.
            cols.append(acc * pl.reciprocal(s, approx=True))

    # (T, B*H*hs) = (32, 128) slab: columns [b0h0 | b0h1 | b1h0 | b1h1].
    y = jnp.concatenate(cols, axis=-1)
    # Block-diagonal projection -> lane-dense (T, B*C) = (32, 128) output:
    # N = 128 on the MXU and unmasked full-lane stores.
    out = (jnp.dot(y, wproj_bd_ref[...], preferred_element_type=jnp.float32)
           + bproj_ref[...])
    # TODO(synk): dropout is 0.0 in the module; a nonzero rate would need an
    # in-kernel pltpu PRNG mask here.
    o_ref[...] = out.astype(o_ref.dtype)


def multi_head_attention(x, wq, wk, wv, w_proj, b_proj):
    """x: (B, T, C); wq/wk/wv: (H, C, hs) (x @ W convention); w_proj: (H*hs, C);
    b_proj: (1, C).  Returns (B, T, C)."""
    B, T, C = x.shape
    H, hs = num_heads, head_size

    # --- wrapper-side packing (analogue of the module constructor) ---
    x_flat = x.reshape(B * T, C)                                # (64, 64)
    w_qkv = jnp.concatenate([wq, wk, wv], axis=0)               # (3*H, C, hs) = (6, 64, 32)
    # Block-diagonal output projection over the batch: (B*H*hs, B*C) = (128, 128).
    w_proj_bd = jnp.kron(jnp.eye(B, dtype=w_proj.dtype), w_proj)
    b_proj_slab = jnp.tile(b_proj, (1, B))                      # (1, B*C) = (1, 128)

    kernel = functools.partial(_fused_mha_kernel, B=B, T=T)
    out_slab = pl.pallas_call(
        kernel,
        out_shape=jax.ShapeDtypeStruct((T, B * C), jnp.float32),
        # Single step: everything resident in VMEM, no pipelining bookkeeping.
        in_specs=[pl.BlockSpec(memory_space=pltpu.MemorySpace.VMEM)] * 4,
        out_specs=pl.BlockSpec(memory_space=pltpu.MemorySpace.VMEM),
    )(x_flat, w_qkv, w_proj_bd, b_proj_slab)

    # Undo the batch-in-lanes layout (cheap XLA reshape/transpose outside the kernel).
    return out_slab.reshape(T, B, C).transpose(1, 0, 2)         # (B, T, C)


def _reference(x, wq, wk, wv, w_proj, b_proj):
    # Pure-JAX mirror of the (buggy-mask) PyTorch forward, for verification.
    B, T, C = x.shape
    outs = []
    for h in range(wq.shape[0]):
        q = x @ wq[h]
        k = x @ wk[h]
        v = x @ wv[h]
        wei = (q @ jnp.swapaxes(k, -2, -1)) * (C ** -0.5)
        wei = jax.nn.softmax(wei, axis=-1)
        outs.append(wei @ v)
    y = jnp.concatenate(outs, axis=-1)
    return y @ w_proj + b_proj[0]


if __name__ == "__main__":
    key = jax.random.PRNGKey(0)
    kx, kq, kk, kv, kp, kb = jax.random.split(key, 6)

    B, T, C, H, hs = 2, block_size, n_embd, num_heads, head_size

    x = jax.random.normal(kx, (B, T, C), dtype=jnp.float32)

    # Deterministic parameter init (PyTorch Linear-style uniform bounds),
    # stored as (in, out) so the kernel can do x @ W directly.
    bnd_in = 1.0 / (C ** 0.5)
    wq = jax.random.uniform(kq, (H, C, hs), jnp.float32, -bnd_in, bnd_in)
    wk = jax.random.uniform(kk, (H, C, hs), jnp.float32, -bnd_in, bnd_in)
    wv = jax.random.uniform(kv, (H, C, hs), jnp.float32, -bnd_in, bnd_in)

    bnd_p = 1.0 / ((H * hs) ** 0.5)
    w_proj = jax.random.uniform(kp, (H * hs, n_embd), jnp.float32, -bnd_p, bnd_p)
    b_proj = jax.random.uniform(kb, (1, n_embd), jnp.float32, -bnd_p, bnd_p)

    out = multi_head_attention(x, wq, wk, wv, w_proj, b_proj)
    out = jax.block_until_ready(out)

    ref = _reference(x, wq, wk, wv, w_proj, b_proj)
    assert out.shape == (B, T, n_embd)
    # Tolerance loosened slightly (vs 1e-5) to cover the EUP approximate
    # reciprocal used for the softmax denominator; still tight enough to catch
    # any real layout/packing/scale bug.
    assert jnp.allclose(out, ref, atol=5e-3, rtol=5e-3), "mismatch vs JAX reference"

    print("KERNEL_OK")
</pallas_src>

<mosaic_0001>
module attributes {stable_mosaic.version = 11 : i64} {
  func.func @_fused_mha_kernel(%arg0: memref<64x64xf32, #tpu.memory_space<vmem>>, %arg1: memref<6x64x32xf32, #tpu.memory_space<vmem>>, %arg2: memref<128x128xf32, #tpu.memory_space<vmem>>, %arg3: memref<1x128xf32, #tpu.memory_space<vmem>>, %arg4: memref<32x128xf32, #tpu.memory_space<vmem>>) attributes {dimension_semantics = [], scalar_prefetch = 0 : i64, scratch_operands = 0 : i64, tpu.core_type = #tpu.core_type<tc>} {
    %c0 = arith.constant 0 : index
    %c0_0 = arith.constant 0 : index
    %0 = vector.load %arg0[%c0, %c0_0] : memref<64x64xf32, #tpu.memory_space<vmem>>, vector<64x64xf32>
    %c0_1 = arith.constant 0 : index
    %c0_2 = arith.constant 0 : index
    %c0_3 = arith.constant 0 : index
    %1 = vector.load %arg1[%c0_1, %c0_2, %c0_3] : memref<6x64x32xf32, #tpu.memory_space<vmem>>, vector<1x64x32xf32>
    %2 = vector.shape_cast %1 : vector<1x64x32xf32> to vector<64x32xf32>
    %cst = arith.constant dense<0.000000e+00> : vector<64x32xf32>
    %3 = tpu.matmul %0, %2, %cst {dimension_numbers = #tpu.dot_dimension_numbers<[1], [0], [0], [1], [0, 0, 1, 1], [], []>} : vector<64x64xf32>, vector<64x32xf32>, vector<64x32xf32> -> vector<64x32xf32>
    %c1 = arith.constant 1 : index
    %c0_4 = arith.constant 0 : index
    %c0_5 = arith.constant 0 : index
    %4 = vector.load %arg1[%c1, %c0_4, %c0_5] : memref<6x64x32xf32, #tpu.memory_space<vmem>>, vector<1x64x32xf32>
    %5 = vector.shape_cast %4 : vector<1x64x32xf32> to vector<64x32xf32>
    %cst_6 = arith.constant dense<0.000000e+00> : vector<64x32xf32>
    %6 = tpu.matmul %0, %5, %cst_6 {dimension_numbers = #tpu.dot_dimension_numbers<[1], [0], [0], [1], [0, 0, 1, 1], [], []>} : vector<64x64xf32>, vector<64x32xf32>, vector<64x32xf32> -> vector<64x32xf32>
    %c2 = arith.constant 2 : index
    %c0_7 = arith.constant 0 : index
    %c0_8 = arith.constant 0 : index
    %7 = vector.load %arg1[%c2, %c0_7, %c0_8] : memref<6x64x32xf32, #tpu.memory_space<vmem>>, vector<1x64x32xf32>
    %8 = vector.shape_cast %7 : vector<1x64x32xf32> to vector<64x32xf32>
    %cst_9 = arith.constant dense<0.000000e+00> : vector<64x32xf32>
    %9 = tpu.matmul %0, %8, %cst_9 {dimension_numbers = #tpu.dot_dimension_numbers<[1], [0], [0], [1], [0, 0, 1, 1], [], []>} : vector<64x64xf32>, vector<64x32xf32>, vector<64x32xf32> -> vector<64x32xf32>
    %c3 = arith.constant 3 : index
    %c0_10 = arith.constant 0 : index
    %c0_11 = arith.constant 0 : index
    %10 = vector.load %arg1[%c3, %c0_10, %c0_11] : memref<6x64x32xf32, #tpu.memory_space<vmem>>, vector<1x64x32xf32>
    %11 = vector.shape_cast %10 : vector<1x64x32xf32> to vector<64x32xf32>
    %cst_12 = arith.constant dense<0.000000e+00> : vector<64x32xf32>
    %12 = tpu.matmul %0, %11, %cst_12 {dimension_numbers = #tpu.dot_dimension_numbers<[1], [0], [0], [1], [0, 0, 1, 1], [], []>} : vector<64x64xf32>, vector<64x32xf32>, vector<64x32xf32> -> vector<64x32xf32>
    %c4 = arith.constant 4 : index
    %c0_13 = arith.constant 0 : index
    %c0_14 = arith.constant 0 : index
    %13 = vector.load %arg1[%c4, %c0_13, %c0_14] : memref<6x64x32xf32, #tpu.memory_space<vmem>>, vector<1x64x32xf32>
    %14 = vector.shape_cast %13 : vector<1x64x32xf32> to vector<64x32xf32>
    %cst_15 = arith.constant dense<0.000000e+00> : vector<64x32xf32>
    %15 = tpu.matmul %0, %14, %cst_15 {dimension_numbers = #tpu.dot_dimension_numbers<[1], [0], [0], [1], [0, 0, 1, 1], [], []>} : vector<64x64xf32>, vector<64x32xf32>, vector<64x32xf32> -> vector<64x32xf32>
    %c5 = arith.constant 5 : index
    %c0_16 = arith.constant 0 : index
    %c0_17 = arith.constant 0 : index
    %16 = vector.load %arg1[%c5, %c0_16, %c0_17] : memref<6x64x32xf32, #tpu.memory_space<vmem>>, vector<1x64x32xf32>
    %17 = vector.shape_cast %16 : vector<1x64x32xf32> to vector<64x32xf32>
    %cst_18 = arith.constant dense<0.000000e+00> : vector<64x32xf32>
    %18 = tpu.matmul %0, %17, %cst_18 {dimension_numbers = #tpu.dot_dimension_numbers<[1], [0], [0], [1], [0, 0, 1, 1], [], []>} : vector<64x64xf32>, vector<64x32xf32>, vector<64x32xf32> -> vector<64x32xf32>
    %19 = vector.extract_strided_slice %3 {offsets = [0, 0], sizes = [32, 32], strides = [1, 1]} : vector<64x32xf32> to vector<32x32xf32>
    %20 = vector.extract_strided_slice %9 {offsets = [0, 0], sizes = [32, 32], strides = [1, 1]} : vector<64x32xf32> to vector<32x32xf32>
    %21 = vector.extract_strided_slice %15 {offsets = [0, 0], sizes = [32, 32], strides = [1, 1]} : vector<64x32xf32> to vector<32x32xf32>
    %cst_19 = arith.constant dense<0.000000e+00> : vector<32x32xf32>
    %22 = tpu.matmul %19, %20, %cst_19 {dimension_numbers = #tpu.dot_dimension_numbers<[1], [1], [0], [0], [0, 0, 1, 0], [], []>} : vector<32x32xf32>, vector<32x32xf32>, vector<32x32xf32> -> vector<32x32xf32>
    %cst_20 = arith.constant 1.250000e-01 : f32
    %23 = vector.broadcast %cst_20 : f32 to vector<32x32xf32>
    %24 = arith.mulf %22, %23 : vector<32x32xf32>
    %cst_21 = arith.constant dense<0xFF800000> : vector<32xf32>
    %25 = vector.multi_reduction <maximumf>, %24, %cst_21 [1] : vector<32x32xf32> to vector<32xf32>
    %26 = vector.shape_cast %25 : vector<32xf32> to vector<32x1xf32>
    %27 = vector.broadcast %26 : vector<32x1xf32> to vector<32x32xf32>
    %28 = arith.subf %24, %27 : vector<32x32xf32>
    %29 = math.exp %28 : vector<32x32xf32>
    %cst_22 = arith.constant dense<0.000000e+00> : vector<32xf32>
    %30 = vector.multi_reduction <add>, %29, %cst_22 [1] : vector<32x32xf32> to vector<32xf32>
    %31 = vector.shape_cast %30 : vector<32xf32> to vector<32x1xf32>
    %cst_23 = arith.constant dense<0.000000e+00> : vector<32x32xf32>
    %32 = tpu.matmul %29, %21, %cst_23 {dimension_numbers = #tpu.dot_dimension_numbers<[1], [0], [0], [1], [0, 0, 1, 1], [], []>} : vector<32x32xf32>, vector<32x32xf32>, vector<32x32xf32> -> vector<32x32xf32>
    %33 = tpu.reciprocal %31 {approx = true} : vector<32x1xf32> -> vector<32x1xf32>
    %34 = vector.broadcast %33 : vector<32x1xf32> to vector<32x32xf32>
    %35 = arith.mulf %32, %34 : vector<32x32xf32>
    %36 = vector.extract_strided_slice %6 {offsets = [0, 0], sizes = [32, 32], strides = [1, 1]} : vector<64x32xf32> to vector<32x32xf32>
    %37 = vector.extract_strided_slice %12 {offsets = [0, 0], sizes = [32, 32], strides = [1, 1]} : vector<64x32xf32> to vector<32x32xf32>
    %38 = vector.extract_strided_slice %18 {offsets = [0, 0], sizes = [32, 32], strides = [1, 1]} : vector<64x32xf32> to vector<32x32xf32>
    %cst_24 = arith.constant dense<0.000000e+00> : vector<32x32xf32>
    %39 = tpu.matmul %36, %37, %cst_24 {dimension_numbers = #tpu.dot_dimension_numbers<[1], [1], [0], [0], [0, 0, 1, 0], [], []>} : vector<32x32xf32>, vector<32x32xf32>, vector<32x32xf32> -> vector<32x32xf32>
    %cst_25 = arith.constant 1.250000e-01 : f32
    %40 = vector.broadcast %cst_25 : f32 to vector<32x32xf32>
    %41 = arith.mulf %39, %40 : vector<32x32xf32>
    %cst_26 = arith.constant dense<0xFF800000> : vector<32xf32>
    %42 = vector.multi_reduction <maximumf>, %41, %cst_26 [1] : vector<32x32xf32> to vector<32xf32>
    %43 = vector.shape_cast %42 : vector<32xf32> to vector<32x1xf32>
    %44 = vector.broadcast %43 : vector<32x1xf32> to vector<32x32xf32>
    %45 = arith.subf %41, %44 : vector<32x32xf32>
    %46 = math.exp %45 : vector<32x32xf32>
    %cst_27 = arith.constant dense<0.000000e+00> : vector<32xf32>
    %47 = vector.multi_reduction <add>, %46, %cst_27 [1] : vector<32x32xf32> to vector<32xf32>
    %48 = vector.shape_cast %47 : vector<32xf32> to vector<32x1xf32>
    %cst_28 = arith.constant dense<0.000000e+00> : vector<32x32xf32>
    %49 = tpu.matmul %46, %38, %cst_28 {dimension_numbers = #tpu.dot_dimension_numbers<[1], [0], [0], [1], [0, 0, 1, 1], [], []>} : vector<32x32xf32>, vector<32x32xf32>, vector<32x32xf32> -> vector<32x32xf32>
    %50 = tpu.reciprocal %48 {approx = true} : vector<32x1xf32> -> vector<32x1xf32>
    %51 = vector.broadcast %50 : vector<32x1xf32> to vector<32x32xf32>
    %52 = arith.mulf %49, %51 : vector<32x32xf32>
    %53 = vector.extract_strided_slice %3 {offsets = [32, 0], sizes = [32, 32], strides = [1, 1]} : vector<64x32xf32> to vector<32x32xf32>
    %54 = vector.extract_strided_slice %9 {offsets = [32, 0], sizes = [32, 32], strides = [1, 1]} : vector<64x32xf32> to vector<32x32xf32>
    %55 = vector.extract_strided_slice %15 {offsets = [32, 0], sizes = [32, 32], strides = [1, 1]} : vector<64x32xf32> to vector<32x32xf32>
    %cst_29 = arith.constant dense<0.000000e+00> : vector<32x32xf32>
    %56 = tpu.matmul %53, %54, %cst_29 {dimension_numbers = #tpu.dot_dimension_numbers<[1], [1], [0], [0], [0, 0, 1, 0], [], []>} : vector<32x32xf32>, vector<32x32xf32>, vector<32x32xf32> -> vector<32x32xf32>
    %cst_30 = arith.constant 1.250000e-01 : f32
    %57 = vector.broadcast %cst_30 : f32 to vector<32x32xf32>
    %58 = arith.mulf %56, %57 : vector<32x32xf32>
    %cst_31 = arith.constant dense<0xFF800000> : vector<32xf32>
    %59 = vector.multi_reduction <maximumf>, %58, %cst_31 [1] : vector<32x32xf32> to vector<32xf32>
    %60 = vector.shape_cast %59 : vector<32xf32> to vector<32x1xf32>
    %61 = vector.broadcast %60 : vector<32x1xf32> to vector<32x32xf32>
    %62 = arith.subf %58, %61 : vector<32x32xf32>
    %63 = math.exp %62 : vector<32x32xf32>
    %cst_32 = arith.constant dense<0.000000e+00> : vector<32xf32>
    %64 = vector.multi_reduction <add>, %63, %cst_32 [1] : vector<32x32xf32> to vector<32xf32>
    %65 = vector.shape_cast %64 : vector<32xf32> to vector<32x1xf32>
    %cst_33 = arith.constant dense<0.000000e+00> : vector<32x32xf32>
    %66 = tpu.matmul %63, %55, %cst_33 {dimension_numbers = #tpu.dot_dimension_numbers<[1], [0], [0], [1], [0, 0, 1, 1], [], []>} : vector<32x32xf32>, vector<32x32xf32>, vector<32x32xf32> -> vector<32x32xf32>
    %67 = tpu.reciprocal %65 {approx = true} : vector<32x1xf32> -> vector<32x1xf32>
    %68 = vector.broadcast %67 : vector<32x1xf32> to vector<32x32xf32>
    %69 = arith.mulf %66, %68 : vector<32x32xf32>
    %70 = vector.extract_strided_slice %6 {offsets = [32, 0], sizes = [32, 32], strides = [1, 1]} : vector<64x32xf32> to vector<32x32xf32>
    %71 = vector.extract_strided_slice %12 {offsets = [32, 0], sizes = [32, 32], strides = [1, 1]} : vector<64x32xf32> to vector<32x32xf32>
    %72 = vector.extract_strided_slice %18 {offsets = [32, 0], sizes = [32, 32], strides = [1, 1]} : vector<64x32xf32> to vector<32x32xf32>
    %cst_34 = arith.constant dense<0.000000e+00> : vector<32x32xf32>
    %73 = tpu.matmul %70, %71, %cst_34 {dimension_numbers = #tpu.dot_dimension_numbers<[1], [1], [0], [0], [0, 0, 1, 0], [], []>} : vector<32x32xf32>, vector<32x32xf32>, vector<32x32xf32> -> vector<32x32xf32>
    %cst_35 = arith.constant 1.250000e-01 : f32
    %74 = vector.broadcast %cst_35 : f32 to vector<32x32xf32>
    %75 = arith.mulf %73, %74 : vector<32x32xf32>
    %cst_36 = arith.constant dense<0xFF800000> : vector<32xf32>
    %76 = vector.multi_reduction <maximumf>, %75, %cst_36 [1] : vector<32x32xf32> to vector<32xf32>
    %77 = vector.shape_cast %76 : vector<32xf32> to vector<32x1xf32>
    %78 = vector.broadcast %77 : vector<32x1xf32> to vector<32x32xf32>
    %79 = arith.subf %75, %78 : vector<32x32xf32>
    %80 = math.exp %79 : vector<32x32xf32>
    %cst_37 = arith.constant dense<0.000000e+00> : vector<32xf32>
    %81 = vector.multi_reduction <add>, %80, %cst_37 [1] : vector<32x32xf32> to vector<32xf32>
    %82 = vector.shape_cast %81 : vector<32xf32> to vector<32x1xf32>
    %cst_38 = arith.constant dense<0.000000e+00> : vector<32x32xf32>
    %83 = tpu.matmul %80, %72, %cst_38 {dimension_numbers = #tpu.dot_dimension_numbers<[1], [0], [0], [1], [0, 0, 1, 1], [], []>} : vector<32x32xf32>, vector<32x32xf32>, vector<32x32xf32> -> vector<32x32xf32>
    %84 = tpu.reciprocal %82 {approx = true} : vector<32x1xf32> -> vector<32x1xf32>
    %85 = vector.broadcast %84 : vector<32x1xf32> to vector<32x32xf32>
    %86 = arith.mulf %83, %85 : vector<32x32xf32>
    %87 = tpu.concatenate %35, %52, %69, %86 in 1 : vector<32x32xf32>, vector<32x32xf32>, vector<32x32xf32>, vector<32x32xf32> -> vector<32x128xf32>
    %c0_39 = arith.constant 0 : index
    %c0_40 = arith.constant 0 : index
    %88 = vector.load %arg2[%c0_39, %c0_40] : memref<128x128xf32, #tpu.memory_space<vmem>>, vector<128x128xf32>
    %cst_41 = arith.constant dense<0.000000e+00> : vector<32x128xf32>
    %89 = tpu.matmul %87, %88, %cst_41 {dimension_numbers = #tpu.dot_dimension_numbers<[1], [0], [0], [1], [0, 0, 1, 1], [], []>} : vector<32x128xf32>, vector<128x128xf32>, vector<32x128xf32> -> vector<32x128xf32>
    %c0_42 = arith.constant 0 : index
    %c0_43 = arith.constant 0 : index
    %90 = vector.load %arg3[%c0_42, %c0_43] : memref<1x128xf32, #tpu.memory_space<vmem>>, vector<1x128xf32>
    %91 = vector.broadcast %90 : vector<1x128xf32> to vector<32x128xf32>
    %92 = arith.addf %89, %91 : vector<32x128xf32>
    %c0_44 = arith.constant 0 : index
    %c0_45 = arith.constant 0 : index
    %93 = vector.load %arg4[%c0_44, %c0_45] : memref<32x128xf32, #tpu.memory_space<vmem>>, vector<32x128xf32>
    tpu.vector_store %arg4[%c0_44, %c0_45], %92 {strides = array<i32>} : memref<32x128xf32, #tpu.memory_space<vmem>>, vector<32x128xf32>,
    return
  }
}

</mosaic_0001>

<llo_original>
// kernel: tpu_custom_call.1
$region0: #{tpu_custom_call.1}
  #allocation0 [shape = 'u32[]', space=smem, size = 0x4, offset = 0x4, fixed_abs, tag = 'smem constant byte address 0x4 - core index']
  #allocation1 [shape = 'u32[72,128]{1,0:T(1,128)}', space=vmem, size = 0x9000, scoped, tag = 'internal scratch']
  %s0 = inlined_call_operand.vmem [shape: f32[64,64], index: 0, kind: input, shape index: {}]
  %s1 = inlined_call_operand.vmem [shape: f32[6,64,32], index: 1, kind: input, shape index: {}]
  %s2 = inlined_call_operand.vmem [shape: f32[128,128], index: 2, kind: input, shape index: {}]
  %s3 = inlined_call_operand.vmem [shape: f32[1,128], index: 3, kind: input, shape index: {}]
  %s4 = inlined_call_operand.hbm [shape: f32[32,128], index: 4, kind: output, shape index: {}]
  %s5 = sld [smem:[#allocation0]]
  $region26: #{tpu_custom_call.1} parent=0
    _
  %s7 = ssub.s32 1, %s5
  %s8 = scalar_select 0, %s7, %s5
  $region1: #{tpu_custom_call.1} parent=0
    #allocation2 [shape = 'u8[16384]{0}', space=vmem, size = 0x4000, scoped, tag = 'output window, operand 0, single buffered']
    #allocation3 [shape = 's32[1]{0}', space=sflag, size = 0x4, scoped, tag = 'scoped memory for tpu_custom_call.1']
    %9 = vsyncpa [#allocation3], 0
    // Predicated region
    $region2: #{tpu_custom_call.1} parent=1 // pred_check
      _
    $region3: #{tpu_custom_call.1} parent=1 // pred_check_branch
      %11 = sbr.rel (0) target = $region5
    $region4: #{tpu_custom_call.1} parent=1 // pred_region
      _
    $region5: #{tpu_custom_call.1} parent=1 // pred_fallthru
      _
    // Predicated region
    $region6: #{tpu_custom_call.1} parent=1 // pred_check
      _
    $region7: #{tpu_custom_call.1} parent=1 // pred_check_branch
      %13 = sbr.rel (0) target = $region9
    $region8: #{tpu_custom_call.1} parent=1 // pred_region
      _
    $region9: #{tpu_custom_call.1} parent=1 // pred_fallthru
      _
    // Predicated region
    $region10: #{tpu_custom_call.1} parent=1 // pred_check
      _
    $region11: #{tpu_custom_call.1} parent=1 // pred_check_branch
      %15 = sbr.rel (0) target = $region13
    $region12: #{tpu_custom_call.1} parent=1 // pred_region
      _
    $region13: #{tpu_custom_call.1} parent=1 // pred_fallthru
      _
    // Predicated region
    $region14: #{tpu_custom_call.1} parent=1 // pred_check
      _
    $region15: #{tpu_custom_call.1} parent=1 // pred_check_branch
      %17 = sbr.rel (0) target = $region17
    $region16: #{tpu_custom_call.1} parent=1 // pred_region
      _
    $region17: #{tpu_custom_call.1} parent=1 // pred_fallthru
      _
    %v18 = vld [vmem:[%s0] sm:$0xff]
    %v19 = vld [vmem:[%s0 + $0x8] sm:$0xff]
    %v20 = vld [vmem:[%s0 + $0x10] sm:$0xff]
    %v21 = vld [vmem:[%s0 + $0x18] sm:$0xff]
    %v22 = vld [vmem:[%s0 + $0x20] sm:$0xff]
    %v23 = vld [vmem:[%s0 + $0x28] sm:$0xff]
    %v24 = vld [vmem:[%s0 + $0x30] sm:$0xff]
    %v25 = vld [vmem:[%s0 + $0x38] sm:$0xff]
    %v26 = vld [vmem:[%s1] sm:$0xff]
    %v27 = vld [vmem:[%s1 + $0x8] sm:$0xff]
    %v28 = vld [vmem:[%s1 + $0x10] sm:$0xff]
    %v29 = vld [vmem:[%s1 + $0x18] sm:$0xff]
    %v30 = vld [vmem:[%s1 + $0x20] sm:$0xff]
    %v31 = vld [vmem:[%s1 + $0x28] sm:$0xff]
    %v32 = vld [vmem:[%s1 + $0x30] sm:$0xff]
    %v33 = vld [vmem:[%s1 + $0x38] sm:$0xff]
    %vm34 = vcmask 523264
    %v36 = vsel %vm34, %v18, 0
    %v39 = vsel %vm34, %v19, 0
    %v42 = vsel %vm34, %v20, 0
    %v45 = vsel %vm34, %v21, 0
    %v48 = vsel %vm34, %v22, 0
    %v51 = vsel %vm34, %v23, 0
    %v54 = vsel %vm34, %v24, 0
    %v57 = vsel %vm34, %v25, 0
    %59 = vmatpush.msra.mxu0 0.0
    %60 = vmatpush.msra.mxu0 0.0
    %61 = vmatpush.msra.mxu0 0.0
    %62 = vmatpush.msra.mxu0 0.0
    %63 = vmatpush.msra.mxu0 0.0
    %64 = vmatpush.msra.mxu0 0.0
    %65 = vmatpush.msra.mxu0 0.0
    %66 = vmatpush.msra.mxu0 0.0
    %67 = vmatpush.msra.mxu0 %v33
    %68 = vmatpush.msra.mxu0 %v32
    %69 = vmatpush.msra.mxu0 %v31
    %70 = vmatpush.msra.mxu0 %v30
    %71 = vmatpush.msra.mxu0 %v29
    %72 = vmatpush.msra.mxu0 %v28
    %73 = vmatpush.msra.mxu0 %v27
    %74 = vmatpush.msra.mxu0 %v26
    %75 = vmatmul.f32.gmra.mxu0 %v36
    %v76 = vpop.f32.mrf.mxu0
    %v77 = vadd.f32 0.0, %v76
    %78 = vmatmul.f32.gmra.mxu0 %v39
    %v79 = vpop.f32.mrf.mxu0
    %v80 = vadd.f32 0.0, %v79
    %81 = vmatmul.f32.gmra.mxu0 %v42
    %v82 = vpop.f32.mrf.mxu0
    %v83 = vadd.f32 0.0, %v82
    %84 = vmatmul.f32.gmra.mxu0 %v45
    %v85 = vpop.f32.mrf.mxu0
    %v86 = vadd.f32 0.0, %v85
    %87 = vmatmul.f32.gmra.mxu0 %v48
    %v88 = vpop.f32.mrf.mxu0
    %v89 = vadd.f32 0.0, %v88
    %90 = vmatmul.f32.gmra.mxu0 %v51
    %v91 = vpop.f32.mrf.mxu0
    %v92 = vadd.f32 0.0, %v91
    %93 = vmatmul.f32.gmra.mxu0 %v54
    %v94 = vpop.f32.mrf.mxu0
    %v95 = vadd.f32 0.0, %v94
    %96 = vmatmul.f32.gmra.mxu0 %v57
    %v97 = vpop.f32.mrf.mxu0
    %v98 = vadd.f32 0.0, %v97
    %99 = vdwg.mxu0
    %s100 = scalar_lea.vmem %s1, 64
    %v101 = vld [vmem:[%s100] sm:$0xff]
    %v102 = vld [vmem:[%s100 + $0x8] sm:$0xff]
    %v103 = vld [vmem:[%s100 + $0x10] sm:$0xff]
    %v104 = vld [vmem:[%s100 + $0x18] sm:$0xff]
    %v105 = vld [vmem:[%s100 + $0x20] sm:$0xff]
    %v106 = vld [vmem:[%s100 + $0x28] sm:$0xff]
    %v107 = vld [vmem:[%s100 + $0x30] sm:$0xff]
    %v108 = vld [vmem:[%s100 + $0x38] sm:$0xff]
    %109 = vmatpush.msra.mxu0 0.0
    %110 = vmatpush.msra.mxu0 0.0
    %111 = vmatpush.msra.mxu0 0.0
    %112 = vmatpush.msra.mxu0 0.0
    %113 = vmatpush.msra.mxu0 0.0
    %114 = vmatpush.msra.mxu0 0.0
    %115 = vmatpush.msra.mxu0 0.0
    %116 = vmatpush.msra.mxu0 0.0
    %117 = vmatpush.msra.mxu0 %v108
    %118 = vmatpush.msra.mxu0 %v107
    %119 = vmatpush.msra.mxu0 %v106
    %120 = vmatpush.msra.mxu0 %v105
    %121 = vmatpush.msra.mxu0 %v104
    %122 = vmatpush.msra.mxu0 %v103
    %123 = vmatpush.msra.mxu0 %v102
    %124 = vmatpush.msra.mxu0 %v101
    %125 = vmatmul.f32.gmra.mxu0 %v36
    %v126 = vpop.f32.mrf.mxu0
    %v127 = vadd.f32 0.0, %v126
    %128 = vmatmul.f32.gmra.mxu0 %v39
    %v129 = vpop.f32.mrf.mxu0
    %v130 = vadd.f32 0.0, %v129
    %131 = vmatmul.f32.gmra.mxu0 %v42
    %v132 = vpop.f32.mrf.mxu0
    %v133 = vadd.f32 0.0, %v132
    %134 = vmatmul.f32.gmra.mxu0 %v45
    %v135 = vpop.f32.mrf.mxu0
    %v136 = vadd.f32 0.0, %v135
    %137 = vmatmul.f32.gmra.mxu0 %v48
    %v138 = vpop.f32.mrf.mxu0
    %v139 = vadd.f32 0.0, %v138
    %140 = vmatmul.f32.gmra.mxu0 %v51
    %v141 = vpop.f32.mrf.mxu0
    %v142 = vadd.f32 0.0, %v141
    %143 = vmatmul.f32.gmra.mxu0 %v54
    %v144 = vpop.f32.mrf.mxu0
    %v145 = vadd.f32 0.0, %v144
    %146 = vmatmul.f32.gmra.mxu0 %v57
    %v147 = vpop.f32.mrf.mxu0
    %v148 = vadd.f32 0.0, %v147
    %149 = vdwg.mxu0
    %s150 = scalar_lea.vmem %s1, 128
    %v151 = vld [vmem:[%s150] sm:$0xff]
    %v152 = vld [vmem:[%s150 + $0x8] sm:$0xff]
    %v153 = vld [vmem:[%s150 + $0x10] sm:$0xff]
    %v154 = vld [vmem:[%s150 + $0x18] sm:$0xff]
    %v155 = vld [vmem:[%s150 + $0x20] sm:$0xff]
    %v156 = vld [vmem:[%s150 + $0x28] sm:$0xff]
    %v157 = vld [vmem:[%s150 + $0x30] sm:$0xff]
    %v158 = vld [vmem:[%s150 + $0x38] sm:$0xff]
    %159 = vmatpush.msra.mxu0 0.0
    %160 = vmatpush.msra.mxu0 0.0
    %161 = vmatpush.msra.mxu0 0.0
    %162 = vmatpush.msra.mxu0 0.0
    %163 = vmatpush.msra.mxu0 0.0
    %164 = vmatpush.msra.mxu0 0.0
    %165 = vmatpush.msra.mxu0 0.0
    %166 = vmatpush.msra.mxu0 0.0
    %167 = vmatpush.msra.mxu0 %v158
    %168 = vmatpush.msra.mxu0 %v157
    %169 = vmatpush.msra.mxu0 %v156
    %170 = vmatpush.msra.mxu0 %v155
    %171 = vmatpush.msra.mxu0 %v154
    %172 = vmatpush.msra.mxu0 %v153
    %173 = vmatpush.msra.mxu0 %v152
    %174 = vmatpush.msra.mxu0 %v151
    %175 = vmatmul.f32.gmra.mxu0 %v36
    %v176 = vpop.f32.mrf.mxu0
    %v177 = vadd.f32 0.0, %v176
    %178 = vmatmul.f32.gmra.mxu0 %v39
    %v179 = vpop.f32.mrf.mxu0
    %v180 = vadd.f32 0.0, %v179
    %181 = vmatmul.f32.gmra.mxu0 %v42
    %v182 = vpop.f32.mrf.mxu0
    %v183 = vadd.f32 0.0, %v182
    %184 = vmatmul.f32.gmra.mxu0 %v45
    %v185 = vpop.f32.mrf.mxu0
    %v186 = vadd.f32 0.0, %v185
    %187 = vmatmul.f32.gmra.mxu0 %v48
    %v188 = vpop.f32.mrf.mxu0
    %v189 = vadd.f32 0.0, %v188
    %190 = vmatmul.f32.gmra.mxu0 %v51
    %v191 = vpop.f32.mrf.mxu0
    %v192 = vadd.f32 0.0, %v191
    %193 = vmatmul.f32.gmra.mxu0 %v54
    %v194 = vpop.f32.mrf.mxu0
    %v195 = vadd.f32 0.0, %v194
    %196 = vmatmul.f32.gmra.mxu0 %v57
    %v197 = vpop.f32.mrf.mxu0
    %v198 = vadd.f32 0.0, %v197
    %199 = vdwg.mxu0
    %s200 = scalar_lea.vmem %s1, 192
    %v201 = vld [vmem:[%s200] sm:$0xff]
    %v202 = vld [vmem:[%s200 + $0x8] sm:$0xff]
    %v203 = vld [vmem:[%s200 + $0x10] sm:$0xff]
    %v204 = vld [vmem:[%s200 + $0x18] sm:$0xff]
    %v205 = vld [vmem:[%s200 + $0x20] sm:$0xff]
    %v206 = vld [vmem:[%s200 + $0x28] sm:$0xff]
    %v207 = vld [vmem:[%s200 + $0x30] sm:$0xff]
    %v208 = vld [vmem:[%s200 + $0x38] sm:$0xff]
    %209 = vmatpush.msra.mxu0 0.0
    %210 = vmatpush.msra.mxu0 0.0
    %211 = vmatpush.msra.mxu0 0.0
    %212 = vmatpush.msra.mxu0 0.0
    %213 = vmatpush.msra.mxu0 0.0
    %214 = vmatpush.msra.mxu0 0.0
    %215 = vmatpush.msra.mxu0 0.0
    %216 = vmatpush.msra.mxu0 0.0
    %217 = vmatpush.msra.mxu0 %v208
    %218 = vmatpush.msra.mxu0 %v207
    %219 = vmatpush.msra.mxu0 %v206
    %220 = vmatpush.msra.mxu0 %v205
    %221 = vmatpush.msra.mxu0 %v204
    %222 = vmatpush.msra.mxu0 %v203
    %223 = vmatpush.msra.mxu0 %v202
    %224 = vmatpush.msra.mxu0 %v201
    %225 = vmatmul.f32.gmra.mxu0 %v36
    %v226 = vpop.f32.mrf.mxu0
    %v227 = vadd.f32 0.0, %v226
    %228 = vmatmul.f32.gmra.mxu0 %v39
    %v229 = vpop.f32.mrf.mxu0
    %v230 = vadd.f32 0.0, %v229
    %231 = vmatmul.f32.gmra.mxu0 %v42
    %v232 = vpop.f32.mrf.mxu0
    %v233 = vadd.f32 0.0, %v232
    %234 = vmatmul.f32.gmra.mxu0 %v45
    %v235 = vpop.f32.mrf.mxu0
    %v236 = vadd.f32 0.0, %v235
    %237 = vmatmul.f32.gmra.mxu0 %v48
    %v238 = vpop.f32.mrf.mxu0
    %v239 = vadd.f32 0.0, %v238
    %240 = vmatmul.f32.gmra.mxu0 %v51
    %v241 = vpop.f32.mrf.mxu0
    %v242 = vadd.f32 0.0, %v241
    %243 = vmatmul.f32.gmra.mxu0 %v54
    %v244 = vpop.f32.mrf.mxu0
    %v245 = vadd.f32 0.0, %v244
    %246 = vmatmul.f32.gmra.mxu0 %v57
    %v247 = vpop.f32.mrf.mxu0
    %v248 = vadd.f32 0.0, %v247
    %249 = vdwg.mxu0
    %s250 = scalar_lea.vmem %s1, 256
    %v251 = vld [vmem:[%s250] sm:$0xff]
    %v252 = vld [vmem:[%s250 + $0x8] sm:$0xff]
    %v253 = vld [vmem:[%s250 + $0x10] sm:$0xff]
    %v254 = vld [vmem:[%s250 + $0x18] sm:$0xff]
    %v255 = vld [vmem:[%s250 + $0x20] sm:$0xff]
    %v256 = vld [vmem:[%s250 + $0x28] sm:$0xff]
    %v257 = vld [vmem:[%s250 + $0x30] sm:$0xff]
    %v258 = vld [vmem:[%s250 + $0x38] sm:$0xff]
    %259 = vmatpush.msra.mxu0 0.0
    %260 = vmatpush.msra.mxu0 0.0
    %261 = vmatpush.msra.mxu0 0.0
    %262 = vmatpush.msra.mxu0 0.0
    %263 = vmatpush.msra.mxu0 0.0
    %264 = vmatpush.msra.mxu0 0.0
    %265 = vmatpush.msra.mxu0 0.0
    %266 = vmatpush.msra.mxu0 0.0
    %267 = vmatpush.msra.mxu0 %v258
    %268 = vmatpush.msra.mxu0 %v257
    %269 = vmatpush.msra.mxu0 %v256
    %270 = vmatpush.msra.mxu0 %v255
    %271 = vmatpush.msra.mxu0 %v254
    %272 = vmatpush.msra.mxu0 %v253
    %273 = vmatpush.msra.mxu0 %v252
    %274 = vmatpush.msra.mxu0 %v251
    %275 = vmatmul.f32.gmra.mxu0 %v36
    %v276 = vpop.f32.mrf.mxu0
    %v277 = vadd.f32 0.0, %v276
    %278 = vmatmul.f32.gmra.mxu0 %v39
    %v279 = vpop.f32.mrf.mxu0
    %v280 = vadd.f32 0.0, %v279
    %281 = vmatmul.f32.gmra.mxu0 %v42
    %v282 = vpop.f32.mrf.mxu0
    %v283 = vadd.f32 0.0, %v282
    %284 = vmatmul.f32.gmra.mxu0 %v45
    %v285 = vpop.f32.mrf.mxu0
    %v286 = vadd.f32 0.0, %v285
    %287 = vmatmul.f32.gmra.mxu0 %v48
    %v288 = vpop.f32.mrf.mxu0
    %v289 = vadd.f32 0.0, %v288
    %290 = vmatmul.f32.gmra.mxu0 %v51
    %v291 = vpop.f32.mrf.mxu0
    %v292 = vadd.f32 0.0, %v291
    %293 = vmatmul.f32.gmra.mxu0 %v54
    %v294 = vpop.f32.mrf.mxu0
    %v295 = vadd.f32 0.0, %v294
    %296 = vmatmul.f32.gmra.mxu0 %v57
    %v297 = vpop.f32.mrf.mxu0
    %v298 = vadd.f32 0.0, %v297
    %299 = vdwg.mxu0
    %s300 = scalar_lea.vmem %s1, 320
    %v301 = vld [vmem:[%s300] sm:$0xff]
    %v302 = vld [vmem:[%s300 + $0x8] sm:$0xff]
    %v303 = vld [vmem:[%s300 + $0x10] sm:$0xff]
    %v304 = vld [vmem:[%s300 + $0x18] sm:$0xff]
    %v305 = vld [vmem:[%s300 + $0x20] sm:$0xff]
    %v306 = vld [vmem:[%s300 + $0x28] sm:$0xff]
    %v307 = vld [vmem:[%s300 + $0x30] sm:$0xff]
    %v308 = vld [vmem:[%s300 + $0x38] sm:$0xff]
    %309 = vmatpush.msra.mxu0 0.0
    %310 = vmatpush.msra.mxu0 0.0
    %311 = vmatpush.msra.mxu0 0.0
    %312 = vmatpush.msra.mxu0 0.0
    %313 = vmatpush.msra.mxu0 0.0
    %314 = vmatpush.msra.mxu0 0.0
    %315 = vmatpush.msra.mxu0 0.0
    %316 = vmatpush.msra.mxu0 0.0
    %317 = vmatpush.msra.mxu0 %v308
    %318 = vmatpush.msra.mxu0 %v307
    %319 = vmatpush.msra.mxu0 %v306
    %320 = vmatpush.msra.mxu0 %v305
    %321 = vmatpush.msra.mxu0 %v304
    %322 = vmatpush.msra.mxu0 %v303
    %323 = vmatpush.msra.mxu0 %v302
    %324 = vmatpush.msra.mxu0 %v301
    %325 = vmatmul.f32.gmra.mxu0 %v36
    %v326 = vpop.f32.mrf.mxu0
    %v327 = vadd.f32 0.0, %v326
    %328 = vmatmul.f32.gmra.mxu0 %v39
    %v329 = vpop.f32.mrf.mxu0
    %v330 = vadd.f32 0.0, %v329
    %331 = vmatmul.f32.gmra.mxu0 %v42
    %v332 = vpop.f32.mrf.mxu0
    %v333 = vadd.f32 0.0, %v332
    %334 = vmatmul.f32.gmra.mxu0 %v45
    %v335 = vpop.f32.mrf.mxu0
    %v336 = vadd.f32 0.0, %v335
    %337 = vmatmul.f32.gmra.mxu0 %v48
    %v338 = vpop.f32.mrf.mxu0
    %v339 = vadd.f32 0.0, %v338
    %340 = vmatmul.f32.gmra.mxu0 %v51
    %v341 = vpop.f32.mrf.mxu0
    %v342 = vadd.f32 0.0, %v341
    %343 = vmatmul.f32.gmra.mxu0 %v54
    %v344 = vpop.f32.mrf.mxu0
    %v345 = vadd.f32 0.0, %v344
    %346 = vmatmul.f32.gmra.mxu0 %v57
    %v347 = vpop.f32.mrf.mxu0
    %v348 = vadd.f32 0.0, %v347
    %349 = vdwg.mxu0
    %vm350 = vcmask 261120
    %v352 = vsel %vm350, %v77, 0
    %v355 = vsel %vm350, %v80, 0
    %v358 = vsel %vm350, %v83, 0
    %v361 = vsel %vm350, %v86, 0
    %v364 = vsel %vm350, %v177, 0
    %v367 = vsel %vm350, %v180, 0
    %v370 = vsel %vm350, %v183, 0
    %v373 = vsel %vm350, %v186, 0
    %375 = vmatpush.xpose.msra.mxu0 0.0
    %376 = vmatpush.xpose.msra.mxu0 0.0
    %377 = vmatpush.xpose.msra.mxu0 0.0
    %378 = vmatpush.xpose.msra.mxu0 0.0
    %379 = vmatpush.xpose.msra.mxu0 0.0
    %380 = vmatpush.xpose.msra.mxu0 0.0
    %381 = vmatpush.xpose.msra.mxu0 0.0
    %382 = vmatpush.xpose.msra.mxu0 0.0
    %383 = vmatpush.xpose.msra.mxu0 0.0
    %384 = vmatpush.xpose.msra.mxu0 0.0
    %385 = vmatpush.xpose.msra.mxu0 0.0
    %386 = vmatpush.xpose.msra.mxu0 0.0
    %387 = vmatpush.xpose.msra.mxu0 %v373
    %388 = vmatpush.xpose.msra.mxu0 %v370
    %389 = vmatpush.xpose.msra.mxu0 %v367
    %390 = vmatpush.xpose.msra.mxu0 %v364
    %391 = vmatmul.f32.gmra.mxu0 %v352
    %v392 = vpop.f32.mrf.mxu0
    %v393 = vadd.f32 0.0, %v392
    %394 = vmatmul.f32.gmra.mxu0 %v355
    %v395 = vpop.f32.mrf.mxu0
    %v396 = vadd.f32 0.0, %v395
    %397 = vmatmul.f32.gmra.mxu0 %v358
    %v398 = vpop.f32.mrf.mxu0
    %v399 = vadd.f32 0.0, %v398
    %400 = vmatmul.f32.gmra.mxu0 %v361
    %v401 = vpop.f32.mrf.mxu0
    %v402 = vadd.f32 0.0, %v401
    %403 = vdwg.mxu0
    %v404 = vmul.f32 %v393, 0.125
    %v405 = vmul.f32 %v396, 0.125
    %v406 = vmul.f32 %v399, 0.125
    %v407 = vmul.f32 %v402, 0.125
    %v408 = vsel %vm350, %v404, -inf
    %409 = vmax.xlane.f32.xlu0 %v408
    %v410 = vpop.xlane.xlu0 %409
    %v411 = vsel %vm350, %v405, -inf
    %412 = vmax.xlane.f32.xlu0 %v411
    %v413 = vpop.xlane.xlu0 %412
    %v414 = vsel %vm350, %v406, -inf
    %415 = vmax.xlane.f32.xlu0 %v414
    %v416 = vpop.xlane.xlu0 %415
    %v417 = vsel %vm350, %v407, -inf
    %418 = vmax.xlane.f32.xlu0 %v417
    %v419 = vpop.xlane.xlu0 %418
    %v420 = vsub.f32 %v404, %v410
    %v421 = vsub.f32 %v405, %v413
    %v422 = vsub.f32 %v406, %v416
    %v423 = vsub.f32 %v407, %v419
    %v424 = vmul.f32 %v420, 1.442695
    %v425 = vpow.pop %v424
    %v426 = vmul.f32 %v421, 1.442695
    %v427 = vpow.pop %v426
    %v428 = vmul.f32 %v422, 1.442695
    %v429 = vpow.pop %v428
    %v430 = vmul.f32 %v423, 1.442695
    %v431 = vpow.pop %v430
    %v432 = vsel %vm350, %v425, 0.0
    %433 = vadd.xlane.f32.xlu0 %v432
    %v434 = vpop.xlane.xlu0 %433
    %v435 = vsel %vm350, %v427, 0.0
    %436 = vadd.xlane.f32.xlu0 %v435
    %v437 = vpop.xlane.xlu0 %436
    %v438 = vsel %vm350, %v429, 0.0
    %439 = vadd.xlane.f32.xlu0 %v438
    %v440 = vpop.xlane.xlu0 %439
    %v441 = vsel %vm350, %v431, 0.0
    %442 = vadd.xlane.f32.xlu0 %v441
    %v443 = vpop.xlane.xlu0 %442
    %v445 = vsel %vm350, %v425, 0
    %v448 = vsel %vm350, %v427, 0
    %v451 = vsel %vm350, %v429, 0
    %v454 = vsel %vm350, %v431, 0
    %456 = vmatpush.msra.mxu0 0.0
    %457 = vmatpush.msra.mxu0 0.0
    %458 = vmatpush.msra.mxu0 0.0
    %459 = vmatpush.msra.mxu0 0.0
    %460 = vmatpush.msra.mxu0 0.0
    %461 = vmatpush.msra.mxu0 0.0
    %462 = vmatpush.msra.mxu0 0.0
    %463 = vmatpush.msra.mxu0 0.0
    %464 = vmatpush.msra.mxu0 0.0
    %465 = vmatpush.msra.mxu0 0.0
    %466 = vmatpush.msra.mxu0 0.0
    %467 = vmatpush.msra.mxu0 0.0
    %468 = vmatpush.msra.mxu0 %v286
    %469 = vmatpush.msra.mxu0 %v283
    %470 = vmatpush.msra.mxu0 %v280
    %471 = vmatpush.msra.mxu0 %v277
    %472 = vmatmul.f32.gmra.mxu0 %v445
    %v473 = vpop.f32.mrf.mxu0
    %v474 = vadd.f32 0.0, %v473
    %475 = vmatmul.f32.gmra.mxu0 %v448
    %v476 = vpop.f32.mrf.mxu0
    %v477 = vadd.f32 0.0, %v476
    %478 = vmatmul.f32.gmra.mxu0 %v451
    %v479 = vpop.f32.mrf.mxu0
    %v480 = vadd.f32 0.0, %v479
    %481 = vmatmul.f32.gmra.mxu0 %v454
    %v482 = vpop.f32.mrf.mxu0
    %v483 = vadd.f32 0.0, %v482
    %484 = vdwg.mxu0
    %v485 = vrcp.pop %v434
    %v486 = vrcp.pop %v437
    %v487 = vrcp.pop %v440
    %v488 = vrcp.pop %v443
    %v489 = vmul.f32 %v474, %v485
    %v490 = vmul.f32 %v477, %v486
    %v491 = vmul.f32 %v480, %v487
    %v492 = vmul.f32 %v483, %v488
    %v494 = vsel %vm350, %v127, 0
    %v497 = vsel %vm350, %v130, 0
    %v500 = vsel %vm350, %v133, 0
    %v503 = vsel %vm350, %v136, 0
    %v506 = vsel %vm350, %v227, 0
    %v509 = vsel %vm350, %v230, 0
    %v512 = vsel %vm350, %v233, 0
    %v515 = vsel %vm350, %v236, 0
    %517 = vmatpush.xpose.msra.mxu0 0.0
    %518 = vmatpush.xpose.msra.mxu0 0.0
    %519 = vmatpush.xpose.msra.mxu0 0.0
    %520 = vmatpush.xpose.msra.mxu0 0.0
    %521 = vmatpush.xpose.msra.mxu0 0.0
    %522 = vmatpush.xpose.msra.mxu0 0.0
    %523 = vmatpush.xpose.msra.mxu0 0.0
    %524 = vmatpush.xpose.msra.mxu0 0.0
    %525 = vmatpush.xpose.msra.mxu0 0.0
    %526 = vmatpush.xpose.msra.mxu0 0.0
    %527 = vmatpush.xpose.msra.mxu0 0.0
    %528 = vmatpush.xpose.msra.mxu0 0.0
    %529 = vmatpush.xpose.msra.mxu0 %v515
    %530 = vmatpush.xpose.msra.mxu0 %v512
    %531 = vmatpush.xpose.msra.mxu0 %v509
    %532 = vmatpush.xpose.msra.mxu0 %v506
    %533 = vmatmul.f32.gmra.mxu0 %v494
    %v534 = vpop.f32.mrf.mxu0
    %v535 = vadd.f32 0.0, %v534
    %536 = vmatmul.f32.gmra.mxu0 %v497
    %v537 = vpop.f32.mrf.mxu0
    %v538 = vadd.f32 0.0, %v537
    %539 = vmatmul.f32.gmra.mxu0 %v500
    %v540 = vpop.f32.mrf.mxu0
    %v541 = vadd.f32 0.0, %v540
    %542 = vmatmul.f32.gmra.mxu0 %v503
    %v543 = vpop.f32.mrf.mxu0
    %v544 = vadd.f32 0.0, %v543
    %545 = vdwg.mxu0
    %v546 = vmul.f32 %v535, 0.125
    %v547 = vmul.f32 %v538, 0.125
    %v548 = vmul.f32 %v541, 0.125
    %v549 = vmul.f32 %v544, 0.125
    %v550 = vsel %vm350, %v546, -inf
    %551 = vmax.xlane.f32.xlu0 %v550
    %v552 = vpop.xlane.xlu0 %551
    %v553 = vsel %vm350, %v547, -inf
    %554 = vmax.xlane.f32.xlu0 %v553
    %v555 = vpop.xlane.xlu0 %554
    %v556 = vsel %vm350, %v548, -inf
    %557 = vmax.xlane.f32.xlu0 %v556
    %v558 = vpop.xlane.xlu0 %557
    %v559 = vsel %vm350, %v549, -inf
    %560 = vmax.xlane.f32.xlu0 %v559
    %v561 = vpop.xlane.xlu0 %560
    %v562 = vsub.f32 %v546, %v552
    %v563 = vsub.f32 %v547, %v555
    %v564 = vsub.f32 %v548, %v558
    %v565 = vsub.f32 %v549, %v561
    %v566 = vmul.f32 %v562, 1.442695
    %v567 = vpow.pop %v566
    %v568 = vmul.f32 %v563, 1.442695
    %v569 = vpow.pop %v568
    %v570 = vmul.f32 %v564, 1.442695
    %v571 = vpow.pop %v570
    %v572 = vmul.f32 %v565, 1.442695
    %v573 = vpow.pop %v572
    %v574 = vsel %vm350, %v567, 0.0
    %575 = vadd.xlane.f32.xlu0 %v574
    %v576 = vpop.xlane.xlu0 %575
    %v577 = vsel %vm350, %v569, 0.0
    %578 = vadd.xlane.f32.xlu0 %v577
    %v579 = vpop.xlane.xlu0 %578
    %v580 = vsel %vm350, %v571, 0.0
    %581 = vadd.xlane.f32.xlu0 %v580
    %v582 = vpop.xlane.xlu0 %581
    %v583 = vsel %vm350, %v573, 0.0
    %584 = vadd.xlane.f32.xlu0 %v583
    %v585 = vpop.xlane.xlu0 %584
    %v587 = vsel %vm350, %v567, 0
    %v590 = vsel %vm350, %v569, 0
    %v593 = vsel %vm350, %v571, 0
    %v596 = vsel %vm350, %v573, 0
    %598 = vmatpush.msra.mxu0 0.0
    %599 = vmatpush.msra.mxu0 0.0
    %600 = vmatpush.msra.mxu0 0.0
    %601 = vmatpush.msra.mxu0 0.0
    %602 = vmatpush.msra.mxu0 0.0
    %603 = vmatpush.msra.mxu0 0.0
    %604 = vmatpush.msra.mxu0 0.0
    %605 = vmatpush.msra.mxu0 0.0
    %606 = vmatpush.msra.mxu0 0.0
    %607 = vmatpush.msra.mxu0 0.0
    %608 = vmatpush.msra.mxu0 0.0
    %609 = vmatpush.msra.mxu0 0.0
    %610 = vmatpush.msra.mxu0 %v336
    %611 = vmatpush.msra.mxu0 %v333
    %612 = vmatpush.msra.mxu0 %v330
    %613 = vmatpush.msra.mxu0 %v327
    %614 = vmatmul.f32.gmra.mxu0 %v587
    %v615 = vpop.f32.mrf.mxu0
    %v616 = vadd.f32 0.0, %v615
    %617 = vmatmul.f32.gmra.mxu0 %v590
    %v618 = vpop.f32.mrf.mxu0
    %v619 = vadd.f32 0.0, %v618
    %620 = vmatmul.f32.gmra.mxu0 %v593
    %v621 = vpop.f32.mrf.mxu0
    %v622 = vadd.f32 0.0, %v621
    %623 = vmatmul.f32.gmra.mxu0 %v596
    %v624 = vpop.f32.mrf.mxu0
    %v625 = vadd.f32 0.0, %v624
    %626 = vdwg.mxu0
    %v627 = vrcp.pop %v576
    %v628 = vrcp.pop %v579
    %v629 = vrcp.pop %v582
    %v630 = vrcp.pop %v585
    %v631 = vmul.f32 %v616, %v627
    %v632 = vmul.f32 %v619, %v628
    %v633 = vmul.f32 %v622, %v629
    %v634 = vmul.f32 %v625, %v630
    %v636 = vsel %vm350, %v89, 0
    %v639 = vsel %vm350, %v92, 0
    %v642 = vsel %vm350, %v95, 0
    %v645 = vsel %vm350, %v98, 0
    %v648 = vsel %vm350, %v189, 0
    %v651 = vsel %vm350, %v192, 0
    %v654 = vsel %vm350, %v195, 0
    %v657 = vsel %vm350, %v198, 0
    %659 = vmatpush.xpose.msra.mxu0 0.0
    %660 = vmatpush.xpose.msra.mxu0 0.0
    %661 = vmatpush.xpose.msra.mxu0 0.0
    %662 = vmatpush.xpose.msra.mxu0 0.0
    %663 = vmatpush.xpose.msra.mxu0 0.0
    %664 = vmatpush.xpose.msra.mxu0 0.0
    %665 = vmatpush.xpose.msra.mxu0 0.0
    %666 = vmatpush.xpose.msra.mxu0 0.0
    %667 = vmatpush.xpose.msra.mxu0 0.0
    %668 = vmatpush.xpose.msra.mxu0 0.0
    %669 = vmatpush.xpose.msra.mxu0 0.0
    %670 = vmatpush.xpose.msra.mxu0 0.0
    %671 = vmatpush.xpose.msra.mxu0 %v657
    %672 = vmatpush.xpose.msra.mxu0 %v654
    %673 = vmatpush.xpose.msra.mxu0 %v651
    %674 = vmatpush.xpose.msra.mxu0 %v648
    %675 = vmatmul.f32.gmra.mxu0 %v636
    %v676 = vpop.f32.mrf.mxu0
    %v677 = vadd.f32 0.0, %v676
    %678 = vmatmul.f32.gmra.mxu0 %v639
    %v679 = vpop.f32.mrf.mxu0
    %v680 = vadd.f32 0.0, %v679
    %681 = vmatmul.f32.gmra.mxu0 %v642
    %v682 = vpop.f32.mrf.mxu0
    %v683 = vadd.f32 0.0, %v682
    %684 = vmatmul.f32.gmra.mxu0 %v645
    %v685 = vpop.f32.mrf.mxu0
    %v686 = vadd.f32 0.0, %v685
    %687 = vdwg.mxu0
    %v688 = vmul.f32 %v677, 0.125
    %v689 = vmul.f32 %v680, 0.125
    %v690 = vmul.f32 %v683, 0.125
    %v691 = vmul.f32 %v686, 0.125
    %v692 = vsel %vm350, %v688, -inf
    %693 = vmax.xlane.f32.xlu0 %v692
    %v694 = vpop.xlane.xlu0 %693
    %v695 = vsel %vm350, %v689, -inf
    %696 = vmax.xlane.f32.xlu0 %v695
    %v697 = vpop.xlane.xlu0 %696
    %v698 = vsel %vm350, %v690, -inf
    %699 = vmax.xlane.f32.xlu0 %v698
    %v700 = vpop.xlane.xlu0 %699
    %v701 = vsel %vm350, %v691, -inf
    %702 = vmax.xlane.f32.xlu0 %v701
    %v703 = vpop.xlane.xlu0 %702
    %v704 = vsub.f32 %v688, %v694
    %v705 = vsub.f32 %v689, %v697
    %v706 = vsub.f32 %v690, %v700
    %v707 = vsub.f32 %v691, %v703
    %v708 = vmul.f32 %v704, 1.442695
    %v709 = vpow.pop %v708
    %v710 = vmul.f32 %v705, 1.442695
    %v711 = vpow.pop %v710
    %v712 = vmul.f32 %v706, 1.442695
    %v713 = vpow.pop %v712
    %v714 = vmul.f32 %v707, 1.442695
    %v715 = vpow.pop %v714
    %v716 = vsel %vm350, %v709, 0.0
    %717 = vadd.xlane.f32.xlu0 %v716
    %v718 = vpop.xlane.xlu0 %717
    %v719 = vsel %vm350, %v711, 0.0
    %720 = vadd.xlane.f32.xlu0 %v719
    %v721 = vpop.xlane.xlu0 %720
    %v722 = vsel %vm350, %v713, 0.0
    %723 = vadd.xlane.f32.xlu0 %v722
    %v724 = vpop.xlane.xlu0 %723
    %v725 = vsel %vm350, %v715, 0.0
    %726 = vadd.xlane.f32.xlu0 %v725
    %v727 = vpop.xlane.xlu0 %726
    %v729 = vsel %vm350, %v709, 0
    %v732 = vsel %vm350, %v711, 0
    %v735 = vsel %vm350, %v713, 0
    %v738 = vsel %vm350, %v715, 0
    %740 = vmatpush.msra.mxu0 0.0
    %741 = vmatpush.msra.mxu0 0.0
    %742 = vmatpush.msra.mxu0 0.0
    %743 = vmatpush.msra.mxu0 0.0
    %744 = vmatpush.msra.mxu0 0.0
    %745 = vmatpush.msra.mxu0 0.0
    %746 = vmatpush.msra.mxu0 0.0
    %747 = vmatpush.msra.mxu0 0.0
    %748 = vmatpush.msra.mxu0 0.0
    %749 = vmatpush.msra.mxu0 0.0
    %750 = vmatpush.msra.mxu0 0.0
    %751 = vmatpush.msra.mxu0 0.0
    %752 = vmatpush.msra.mxu0 %v298
    %753 = vmatpush.msra.mxu0 %v295
    %754 = vmatpush.msra.mxu0 %v292
    %755 = vmatpush.msra.mxu0 %v289
    %756 = vmatmul.f32.gmra.mxu0 %v729
    %v757 = vpop.f32.mrf.mxu0
    %v758 = vadd.f32 0.0, %v757
    %759 = vmatmul.f32.gmra.mxu0 %v732
    %v760 = vpop.f32.mrf.mxu0
    %v761 = vadd.f32 0.0, %v760
    %762 = vmatmul.f32.gmra.mxu0 %v735
    %v763 = vpop.f32.mrf.mxu0
    %v764 = vadd.f32 0.0, %v763
    %765 = vmatmul.f32.gmra.mxu0 %v738
    %v766 = vpop.f32.mrf.mxu0
    %v767 = vadd.f32 0.0, %v766
    %768 = vdwg.mxu0
    %v769 = vrcp.pop %v718
    %v770 = vrcp.pop %v721
    %v771 = vrcp.pop %v724
    %v772 = vrcp.pop %v727
    %v773 = vmul.f32 %v758, %v769
    %v774 = vmul.f32 %v761, %v770
    %v775 = vmul.f32 %v764, %v771
    %v776 = vmul.f32 %v767, %v772
    %v778 = vsel %vm350, %v139, 0
    %v781 = vsel %vm350, %v142, 0
    %v784 = vsel %vm350, %v145, 0
    %v787 = vsel %vm350, %v148, 0
    %v790 = vsel %vm350, %v239, 0
    %v793 = vsel %vm350, %v242, 0
    %v796 = vsel %vm350, %v245, 0
    %v799 = vsel %vm350, %v248, 0
    %801 = vmatpush.xpose.msra.mxu0 0.0
    %802 = vmatpush.xpose.msra.mxu0 0.0
    %803 = vmatpush.xpose.msra.mxu0 0.0
    %804 = vmatpush.xpose.msra.mxu0 0.0
    %805 = vmatpush.xpose.msra.mxu0 0.0
    %806 = vmatpush.xpose.msra.mxu0 0.0
    %807 = vmatpush.xpose.msra.mxu0 0.0
    %808 = vmatpush.xpose.msra.mxu0 0.0
    %809 = vmatpush.xpose.msra.mxu0 0.0
    %810 = vmatpush.xpose.msra.mxu0 0.0
    %811 = vmatpush.xpose.msra.mxu0 0.0
    %812 = vmatpush.xpose.msra.mxu0 0.0
    %813 = vmatpush.xpose.msra.mxu0 %v799
    %814 = vmatpush.xpose.msra.mxu0 %v796
    %815 = vmatpush.xpose.msra.mxu0 %v793
    %816 = vmatpush.xpose.msra.mxu0 %v790
    %817 = vmatmul.f32.gmra.mxu0 %v778
    %v818 = vpop.f32.mrf.mxu0
    %v819 = vadd.f32 0.0, %v818
    %820 = vmatmul.f32.gmra.mxu0 %v781
    %v821 = vpop.f32.mrf.mxu0
    %v822 = vadd.f32 0.0, %v821
    %823 = vmatmul.f32.gmra.mxu0 %v784
    %v824 = vpop.f32.mrf.mxu0
    %v825 = vadd.f32 0.0, %v824
    %826 = vmatmul.f32.gmra.mxu0 %v787
    %v827 = vpop.f32.mrf.mxu0
    %v828 = vadd.f32 0.0, %v827
    %829 = vdwg.mxu0
    %v830 = vmul.f32 %v819, 0.125
    %v831 = vmul.f32 %v822, 0.125
    %v832 = vmul.f32 %v825, 0.125
    %v833 = vmul.f32 %v828, 0.125
    %v834 = vsel %vm350, %v830, -inf
    %835 = vmax.xlane.f32.xlu0 %v834
    %v836 = vpop.xlane.xlu0 %835
    %v837 = vsel %vm350, %v831, -inf
    %838 = vmax.xlane.f32.xlu0 %v837
    %v839 = vpop.xlane.xlu0 %838
    %v840 = vsel %vm350, %v832, -inf
    %841 = vmax.xlane.f32.xlu0 %v840
    %v842 = vpop.xlane.xlu0 %841
    %v843 = vsel %vm350, %v833, -inf
    %844 = vmax.xlane.f32.xlu0 %v843
    %v845 = vpop.xlane.xlu0 %844
    %v846 = vsub.f32 %v830, %v836
    %v847 = vsub.f32 %v831, %v839
    %v848 = vsub.f32 %v832, %v842
    %v849 = vsub.f32 %v833, %v845
    %v850 = vmul.f32 %v846, 1.442695
    %v851 = vpow.pop %v850
    %v852 = vmul.f32 %v847, 1.442695
    %v853 = vpow.pop %v852
    %v854 = vmul.f32 %v848, 1.442695
    %v855 = vpow.pop %v854
    %v856 = vmul.f32 %v849, 1.442695
    %v857 = vpow.pop %v856
    %v858 = vsel %vm350, %v851, 0.0
    %859 = vadd.xlane.f32.xlu0 %v858
    %v860 = vpop.xlane.xlu0 %859
    %v861 = vsel %vm350, %v853, 0.0
    %862 = vadd.xlane.f32.xlu0 %v861
    %v863 = vpop.xlane.xlu0 %862
    %v864 = vsel %vm350, %v855, 0.0
    %865 = vadd.xlane.f32.xlu0 %v864
    %v866 = vpop.xlane.xlu0 %865
    %v867 = vsel %vm350, %v857, 0.0
    %868 = vadd.xlane.f32.xlu0 %v867
    %v869 = vpop.xlane.xlu0 %868
    %v871 = vsel %vm350, %v851, 0
    %v874 = vsel %vm350, %v853, 0
    %v877 = vsel %vm350, %v855, 0
    %v880 = vsel %vm350, %v857, 0
    %882 = vmatpush.msra.mxu0 0.0
    %883 = vmatpush.msra.mxu0 0.0
    %884 = vmatpush.msra.mxu0 0.0
    %885 = vmatpush.msra.mxu0 0.0
    %886 = vmatpush.msra.mxu0 0.0
    %887 = vmatpush.msra.mxu0 0.0
    %888 = vmatpush.msra.mxu0 0.0
    %889 = vmatpush.msra.mxu0 0.0
    %890 = vmatpush.msra.mxu0 0.0
    %891 = vmatpush.msra.mxu0 0.0
    %892 = vmatpush.msra.mxu0 0.0
    %893 = vmatpush.msra.mxu0 0.0
    %894 = vmatpush.msra.mxu0 %v348
    %895 = vmatpush.msra.mxu0 %v345
    %896 = vmatpush.msra.mxu0 %v342
    %897 = vmatpush.msra.mxu0 %v339
    %898 = vmatmul.f32.gmra.mxu0 %v871
    %v899 = vpop.f32.mrf.mxu0
    %v900 = vadd.f32 0.0, %v899
    %901 = vmatmul.f32.gmra.mxu0 %v874
    %v902 = vpop.f32.mrf.mxu0
    %v903 = vadd.f32 0.0, %v902
    %904 = vmatmul.f32.gmra.mxu0 %v877
    %v905 = vpop.f32.mrf.mxu0
    %v906 = vadd.f32 0.0, %v905
    %907 = vmatmul.f32.gmra.mxu0 %v880
    %v908 = vpop.f32.mrf.mxu0
    %v909 = vadd.f32 0.0, %v908
    %910 = vdwg.mxu0
    %v911 = vrcp.pop %v860
    %v912 = vrcp.pop %v863
    %v913 = vrcp.pop %v866
    %v914 = vrcp.pop %v869
    %v915 = vmul.f32 %v900, %v911
    %v916 = vmul.f32 %v903, %v912
    %v917 = vmul.f32 %v906, %v913
    %v918 = vmul.f32 %v909, %v914
    %923 = vrot.lane.b32.xlu0 %v631, 32
    %v924 = vpop.permute.xlu0 %923
    %925 = vrot.lane.b32.xlu0 %v632, 32
    %v926 = vpop.permute.xlu0 %925
    %927 = vrot.lane.b32.xlu0 %v633, 32
    %v928 = vpop.permute.xlu0 %927
    %929 = vrot.lane.b32.xlu0 %v634, 32
    %v930 = vpop.permute.xlu0 %929
    %939 = vrot.lane.b32.xlu0 %v773, 64
    %v940 = vpop.permute.xlu0 %939
    %941 = vrot.lane.b32.xlu0 %v774, 64
    %v942 = vpop.permute.xlu0 %941
    %943 = vrot.lane.b32.xlu0 %v775, 64
    %v944 = vpop.permute.xlu0 %943
    %945 = vrot.lane.b32.xlu0 %v776, 64
    %v946 = vpop.permute.xlu0 %945
    %955 = vrot.lane.b32.xlu0 %v915, 96
    %v956 = vpop.permute.xlu0 %955
    %957 = vrot.lane.b32.xlu0 %v916, 96
    %v958 = vpop.permute.xlu0 %957
    %959 = vrot.lane.b32.xlu0 %v917, 96
    %v960 = vpop.permute.xlu0 %959
    %961 = vrot.lane.b32.xlu0 %v918, 96
    %v962 = vpop.permute.xlu0 %961
    %v967 = vsel %vm350, %v489, %v924
    %v968 = vsel %vm350, %v490, %v926
    %v969 = vsel %vm350, %v491, %v928
    %v970 = vsel %vm350, %v492, %v930
    %v971 = vsel %vm34, %v967, %v940
    %v972 = vsel %vm34, %v968, %v942
    %v973 = vsel %vm34, %v969, %v944
    %v974 = vsel %vm34, %v970, %v946
    %vm975 = vcmask 785408
    %v976 = vsel %vm975, %v971, %v956
    %v977 = vsel %vm975, %v972, %v958
    %v978 = vsel %vm975, %v973, %v960
    %v979 = vsel %vm975, %v974, %v962
    %v980 = vld [vmem:[%s2] sm:$0xff]
    %v981 = vld [vmem:[%s2 + $0x8] sm:$0xff]
    %v982 = vld [vmem:[%s2 + $0x10] sm:$0xff]
    %v983 = vld [vmem:[%s2 + $0x18] sm:$0xff]
    %v984 = vld [vmem:[%s2 + $0x20] sm:$0xff]
    %v985 = vld [vmem:[%s2 + $0x28] sm:$0xff]
    %v986 = vld [vmem:[%s2 + $0x30] sm:$0xff]
    %v987 = vld [vmem:[%s2 + $0x38] sm:$0xff]
    %v988 = vld [vmem:[%s2 + $0x40] sm:$0xff]
    %v989 = vld [vmem:[%s2 + $0x48] sm:$0xff]
    %v990 = vld [vmem:[%s2 + $0x50] sm:$0xff]
    %v991 = vld [vmem:[%s2 + $0x58] sm:$0xff]
    %v992 = vld [vmem:[%s2 + $0x60] sm:$0xff]
    %v993 = vld [vmem:[%s2 + $0x68] sm:$0xff]
    %v994 = vld [vmem:[%s2 + $0x70] sm:$0xff]
    %v995 = vld [vmem:[%s2 + $0x78] sm:$0xff]
    %v996 = vld [vmem:[%s3] sm:$0x1]
    %v998 = vperm.slane %v996, 0
    %1000 = vmatpush.msra.mxu0 %v995
    %1001 = vmatpush.msra.mxu0 %v994
    %1002 = vmatpush.msra.mxu0 %v993
    %1003 = vmatpush.msra.mxu0 %v992
    %1004 = vmatpush.msra.mxu0 %v991
    %1005 = vmatpush.msra.mxu0 %v990
    %1006 = vmatpush.msra.mxu0 %v989
    %1007 = vmatpush.msra.mxu0 %v988
    %1008 = vmatpush.msra.mxu0 %v987
    %1009 = vmatpush.msra.mxu0 %v986
    %1010 = vmatpush.msra.mxu0 %v985
    %1011 = vmatpush.msra.mxu0 %v984
    %1012 = vmatpush.msra.mxu0 %v983
    %1013 = vmatpush.msra.mxu0 %v982
    %1014 = vmatpush.msra.mxu0 %v981
    %1015 = vmatpush.msra.mxu0 %v980
    %1016 = vmatmul.f32.gmra.mxu0 %v976
    %v1017 = vpop.f32.mrf.mxu0
    %v1018 = vadd.f32 %v998, %v1017
    %1019 = vmatmul.f32.gmra.mxu0 %v977
    %v1020 = vpop.f32.mrf.mxu0
    %v1021 = vadd.f32 %v998, %v1020
    %1022 = vmatmul.f32.gmra.mxu0 %v978
    %v1023 = vpop.f32.mrf.mxu0
    %v1024 = vadd.f32 %v998, %v1023
    %1025 = vmatmul.f32.gmra.mxu0 %v979
    %v1026 = vpop.f32.mrf.mxu0
    %v1027 = vadd.f32 %v998, %v1026
    %1028 = vdwg.mxu0
    %1029 = vst [vmem:[#allocation2] sm:$0xff] %v1018
    %1030 = vst [vmem:[#allocation2 + $0x8] sm:$0xff] %v1021
    %1031 = vst [vmem:[#allocation2 + $0x10] sm:$0xff] %v1024
    %1032 = vst [vmem:[#allocation2 + $0x18] sm:$0xff] %v1027
    // Predicated region
    $region18: #{tpu_custom_call.1} parent=1 // pred_check
      _
    $region19: #{tpu_custom_call.1} parent=1 // pred_check_branch
      %1034 = sbr.rel (0) target = $region21
    $region20: #{tpu_custom_call.1} parent=1 // pred_region
      %1036 = vsyncadd [#allocation3], 0
      %s1037 = sshll.u32 [#allocation2], 4
      %s1038 = int_to_ptr.vmem [resolvable:$true] %s1037
      %s1039 = sshll.u32 %s4, 4
      %s1040 = int_to_ptr.hbm [resolvable:$true] %s1039
      %1045 = dma.vmem_to_hbm [thread:$0]  %s1038, 512, %s1040, [#allocation3], 128, 128, 8
    $region21: #{tpu_custom_call.1} parent=1 // pred_fallthru
      _
    // Predicated region
    $region22: #{tpu_custom_call.1} parent=1 // pred_check
      _
    $region23: #{tpu_custom_call.1} parent=1 // pred_check_branch
      %1047 = sbr.rel (0) target = $region25
    $region24: #{tpu_custom_call.1} parent=1 // pred_region
      %1049 = dma.done [#allocation3], 512
    $region25: #{tpu_custom_call.1} parent=1 // pred_fallthru
      _
    %1050 = vsyncpa [#allocation3], 1

</llo_original>
